<compile_context>
chip_gen: v6e
topology: v6e:2x2x1
jax: 0.10.0
libtpu: 0.0.40
codegen_flags: <defaults>
</compile_context>

<pallas_src>
import functools

import jax
import jax.numpy as jnp
from jax.experimental import pallas as pl
from jax.experimental.pallas import tpu as pltpu


# ----------------------------------------------------------------- utilities

def _pick_tile(dim, pref, align):
    """Largest tile <= pref that is a multiple of `align` and divides `dim`,
    else the full dim (block == full dim is always legal)."""
    if dim <= pref:
        return dim
    t = (pref // align) * align
    while t >= align:
        if dim % t == 0:
            return t
        t -= align
    return dim


# ------------------------------------------------------------------- kernels

def _ln_matmul_kernel(x_ref, w_ref, b_ref, o_ref, *, eps):
    """Fused LayerNorm + projection.

    x_ref: (tm, K) raw f32 input (full feature row resident).
    w_ref: (K, tn) bf16 weights with LN gamma (and any scale) folded in.
    b_ref: (1, tn) f32 bias = beta @ W (+ original bias if any).
    """
    x = x_ref[...].astype(jnp.float32)
    mean = jnp.mean(x, axis=-1, keepdims=True)
    xc = x - mean
    var = jnp.mean(xc * xc, axis=-1, keepdims=True)
    xn = (xc * jax.lax.rsqrt(var + eps)).astype(w_ref.dtype)       # bf16 for MXU
    acc = jnp.dot(xn, w_ref[...], preferred_element_type=jnp.float32)
    o_ref[...] = (acc + b_ref[...]).astype(o_ref.dtype)


def _matmul_bias_kernel(x_ref, w_ref, b_ref, o_ref, acc_ref):
    """x(tm,tk) @ w(tk,tn) with K-tiled f32 accumulator; bias loaded at k==0."""
    @pl.when(pl.program_id(2) == 0)
    def _():
        acc_ref[...] = jnp.broadcast_to(b_ref[...].astype(jnp.float32),
                                        acc_ref.shape)

    acc_ref[...] += jnp.dot(x_ref[...], w_ref[...],
                            preferred_element_type=jnp.float32)

    @pl.when(pl.program_id(2) == pl.num_programs(2) - 1)
    def _():
        o_ref[...] = acc_ref[...].astype(o_ref.dtype)


def _flash_attention_kernel(q_ref, k_ref, v_ref, o_ref, m_sc, l_sc, acc_sc):
    # q_ref: (1, tq, d) bf16 (softmax scale already folded into the q proj)
    # k_ref / v_ref: (1, tkv, d) bf16
    kv_i = pl.program_id(2)

    @pl.when(kv_i == 0)
    def _():
        m_sc[...] = jnp.full_like(m_sc, -jnp.inf)
        l_sc[...] = jnp.zeros_like(l_sc)
        acc_sc[...] = jnp.zeros_like(acc_sc)

    q = q_ref[0]
    k = k_ref[0]
    v = v_ref[0]

    # q @ k^T without transposing k (contract last dims directly on the MXU).
    s = jax.lax.dot_general(q, k, (((1,), (1,)), ((), ())),
                            preferred_element_type=jnp.float32)     # (tq, tkv)

    m_prev = m_sc[...]
    m_new = jnp.maximum(m_prev, jnp.max(s, axis=-1, keepdims=True))
    alpha = jnp.exp(m_prev - m_new)
    p = jnp.exp(s - m_new)

    l_sc[...] = alpha * l_sc[...] + jnp.sum(p, axis=-1, keepdims=True)
    acc_sc[...] = alpha * acc_sc[...] + jnp.dot(
        p.astype(v.dtype), v, preferred_element_type=jnp.float32)
    m_sc[...] = m_new

    @pl.when(kv_i == pl.num_programs(2) - 1)
    def _():
        o_ref[0] = (acc_sc[...] * pl.reciprocal(l_sc[...], approx=True)
                    ).astype(o_ref.dtype)


# ------------------------------------------------------------------ wrappers

def pallas_ln_linear(x, w_folded, b_folded, *, eps=1e-5,
                     out_dtype=jnp.bfloat16, tm_pref=512, tn_pref=512):
    """Fused LayerNorm(x) @ W + b.  Requires the full K (feature) row per tile."""
    M, K = x.shape
    Kw, N = w_folded.shape
    assert K == Kw

    tm = _pick_tile(M, tm_pref, 8)
    tn = _pick_tile(N, tn_pref, 128)

    # Keep double-buffered footprint well under the scoped-VMEM default
    # (16 MiB v5e, 32 MiB v6e/v7x): shrink tm if K is very large.
    def footprint(tm_, tn_):
        return 2 * (tm_ * K * x.dtype.itemsize + K * tn_ * 2 + tm_ * tn_ * 2) + tn_ * 4
    while footprint(tm, tn) > 12 * 1024 * 1024 and tm % 16 == 0 and tm > 8:
        tm //= 2

    # Don't collapse the parallel grid to 1x1 (v7x has 2 TensorCores).
    if (M // tm) * (N // tn) == 1 and tm % 16 == 0:
        tm //= 2

    kern = functools.partial(_ln_matmul_kernel, eps=eps)
    return pl.pallas_call(
        kern,
        out_shape=jax.ShapeDtypeStruct((M, N), out_dtype),
        grid=(M // tm, N // tn),
        in_specs=[pl.BlockSpec((tm, K), lambda i, j: (i, 0)),
                  pl.BlockSpec((K, tn), lambda i, j: (0, j)),
                  pl.BlockSpec((1, tn), lambda i, j: (0, j))],
        out_specs=pl.BlockSpec((tm, tn), lambda i, j: (i, j)),
        compiler_params=pltpu.CompilerParams(
            dimension_semantics=("parallel", "parallel")),
    )(x, w_folded, b_folded.reshape(1, N).astype(jnp.float32))


def pallas_linear(x, w, b=None, *, out_dtype=None,
                  tm_pref=512, tn_pref=512, tk_pref=512):
    """Tiled x(M,K) @ w(K,N) + b with f32 VMEM accumulator over K."""
    M, K = x.shape
    Kw, N = w.shape
    assert K == Kw
    out_dtype = out_dtype or x.dtype

    tm = _pick_tile(M, tm_pref, 8)
    tn = _pick_tile(N, tn_pref, 128)
    tk = _pick_tile(K, tk_pref, 128)

    # Don't collapse the parallel grid to 1x1 (v7x has 2 TensorCores).
    if (M // tm) * (N // tn) == 1 and tm % 16 == 0:
        tm //= 2

    grid = (M // tm, N // tn, K // tk)
    if b is None:
        b = jnp.zeros((N,), jnp.float32)

    return pl.pallas_call(
        _matmul_bias_kernel,
        out_shape=jax.ShapeDtypeStruct((M, N), out_dtype),
        grid=grid,
        in_specs=[pl.BlockSpec((tm, tk), lambda i, j, k: (i, k)),
                  pl.BlockSpec((tk, tn), lambda i, j, k: (k, j)),
                  pl.BlockSpec((1, tn), lambda i, j, k: (0, j))],
        out_specs=pl.BlockSpec((tm, tn), lambda i, j, k: (i, j)),
        scratch_shapes=[pltpu.VMEM((tm, tn), jnp.float32)],
        compiler_params=pltpu.CompilerParams(
            dimension_semantics=("parallel", "parallel", "arbitrary")),
    )(x, w, b.reshape(1, N).astype(jnp.float32))


def flash_attention(q, kv, *, heads, head_dim, block_q=256, block_kv=2048,
                    out_dtype=jnp.bfloat16):
    """q: (B, N, h*d); kv: (B, M, 2*h*d) with K in [..., :h*d], V in [..., h*d:].

    Returns (B, N, h*d).  Flash-style online softmax; K/V are read straight out
    of the fused KV-projection output via BlockSpec index_maps (no JAX slicing).
    """
    B, N, inner = q.shape
    _, M, two_inner = kv.shape
    H, d = heads, head_dim
    assert inner == H * d and two_inner == 2 * inner

    tq = _pick_tile(N, block_q, 8)
    tkv = _pick_tile(M, block_kv, 8)
    nq, nkv = N // tq, M // tkv
    grid = (B * H, nq, nkv)

    # Fast path: head slice is lane-aligned -> heads (and the K/V halves of the
    # fused kv tensor) are selected with BlockSpec index_maps; no JAX-side
    # transposes and the attention output is written lane-dense as (B, N, h*d).
    lane_ok = (d % 128 == 0)
    if lane_ok:
        q_spec = pl.BlockSpec((1, tq, d), lambda bh, qi, ki: (bh // H, qi, bh % H))
        k_spec = pl.BlockSpec((1, tkv, d), lambda bh, qi, ki: (bh // H, ki, bh % H))
        v_spec = pl.BlockSpec((1, tkv, d), lambda bh, qi, ki: (bh // H, ki, H + bh % H))
        o_spec = pl.BlockSpec((1, tq, d), lambda bh, qi, ki: (bh // H, qi, bh % H))
        out_shape = jax.ShapeDtypeStruct((B, N, inner), out_dtype)
        args = (q, kv, kv)
    else:
        # TODO(synk): lane-narrow head_dim; falls back to JAX head/KV split
        # (extra HBM passes + masked stores).
        k_full = kv[:, :, :inner]
        v_full = kv[:, :, inner:]

        def split(t, seq):
            return (t.reshape(B, seq, H, d).transpose(0, 2, 1, 3)
                     .reshape(B * H, seq, d))

        args = (split(q, N), split(k_full, M), split(v_full, M))
        q_spec = pl.BlockSpec((1, tq, d), lambda bh, qi, ki: (bh, qi, 0))
        k_spec = pl.BlockSpec((1, tkv, d), lambda bh, qi, ki: (bh, ki, 0))
        v_spec = k_spec
        o_spec = pl.BlockSpec((1, tq, d), lambda bh, qi, ki: (bh, qi, 0))
        out_shape = jax.ShapeDtypeStruct((B * H, N, d), out_dtype)

    out = pl.pallas_call(
        _flash_attention_kernel,
        out_shape=out_shape,
        grid=grid,
        in_specs=[q_spec, k_spec, v_spec],
        out_specs=o_spec,
        scratch_shapes=[pltpu.VMEM((tq, 1), jnp.float32),
                        pltpu.VMEM((tq, 1), jnp.float32),
                        pltpu.VMEM((tq, d), jnp.float32)],
        compiler_params=pltpu.CompilerParams(
            dimension_semantics=("parallel", "parallel", "arbitrary")),
    )(*args)

    if not lane_ok:
        out = (out.reshape(B, H, N, d).transpose(0, 2, 1, 3)
                  .reshape(B, N, inner))
    return out


# -------------------------------------------------------------------- module

class CrossAttentionPallas:
    """CrossAttention = LayerNorm(q), LayerNorm(kv), MultiHeadAttention."""

    def __init__(self, q_dim, kv_dim, num_heads, head_dim, dropout=0.0,
                 key=None, block_q=256, block_kv=2048):
        inner = num_heads * head_dim
        self.q_dim, self.kv_dim = q_dim, kv_dim
        self.heads, self.head_dim = num_heads, head_dim
        self.scale = head_dim ** (-0.5)
        self.dropout = dropout  # p == 0.0 -> identity
        self.block_q, self.block_kv = block_q, block_kv
        self.ln_eps = 1e-5

        key = jax.random.PRNGKey(0) if key is None else key
        ks = jax.random.split(key, 8)

        def init(k, shape, fan_in):
            return jax.random.normal(k, shape, jnp.float32) * (fan_in ** -0.5)

        # f32 master params (PyTorch nn.Linear weight is (out,in); stored transposed).
        self.w_q = init(ks[0], (q_dim, inner), q_dim)
        self.w_k = init(ks[1], (kv_dim, inner), kv_dim)      # to_kv split into k / v
        self.w_v = init(ks[2], (kv_dim, inner), kv_dim)
        self.w_out = init(ks[3], (inner, q_dim), inner)
        self.b_out = init(ks[4], (q_dim,), inner)
        self.q_gamma = 1.0 + 0.1 * jax.random.normal(ks[5], (q_dim,), jnp.float32)
        self.q_beta = 0.1 * jax.random.normal(ks[6], (q_dim,), jnp.float32)
        self.kv_gamma = 1.0 + 0.1 * jax.random.normal(ks[7], (kv_dim,), jnp.float32)
        self.kv_beta = jnp.zeros((kv_dim,), jnp.float32)

        # Fused / folded parameters (done once, outside any kernel):
        #   LN(x) @ W = ((x-mean)*rsqrt(var)) @ (gamma[:,None]*W) + beta @ W
        # and the softmax scale is folded into the Q projection.
        self.wq_f = (self.q_gamma[:, None] * self.w_q * self.scale
                     ).astype(jnp.bfloat16)
        self.bq_f = (self.q_beta @ self.w_q) * self.scale                # (inner,)
        w_kv = jnp.concatenate([self.w_k, self.w_v], axis=1)            # (kv_dim, 2*inner)
        self.wkv_f = (self.kv_gamma[:, None] * w_kv).astype(jnp.bfloat16)
        self.bkv_f = self.kv_beta @ w_kv                                 # (2*inner,)
        self.w_out_bf16 = self.w_out.astype(jnp.bfloat16)

    def __call__(self, x_q, x_kv):
        B, N, _ = x_q.shape
        _, M, _ = x_kv.shape
        H, d = self.heads, self.head_dim
        inner = H * d

        # Fused LayerNorm + projection (Q in one kernel; K and V fused into one
        # matmul over the normalized KV input -> (B, M, 2*inner) bf16).
        q = pallas_ln_linear(x_q.reshape(B * N, self.q_dim),
                             self.wq_f, self.bq_f,
                             eps=self.ln_eps).reshape(B, N, inner)
        kv = pallas_ln_linear(x_kv.reshape(B * M, self.kv_dim),
                              self.wkv_f, self.bkv_f,
                              eps=self.ln_eps).reshape(B, M, 2 * inner)

        # Flash attention reading K/V directly from the fused kv tensor.
        # Dropout p=0.0 -> identity.
        attn = flash_attention(q, kv, heads=H, head_dim=d,
                               block_q=self.block_q, block_kv=self.block_kv)

        # Output projection (bias initialized into the accumulator; f32 result).
        out = pallas_linear(attn.reshape(B * N, inner), self.w_out_bf16,
                            self.b_out, out_dtype=jnp.float32)
        return out.reshape(B, N, self.q_dim)


# ----------------------------------------------------------------- reference

def reference_forward(mod, x_q, x_kv):
    def ln(x, g, b, eps=1e-5):
        mu = jnp.mean(x, axis=-1, keepdims=True)
        var = jnp.mean((x - mu) ** 2, axis=-1, keepdims=True)
        return (x - mu) / jnp.sqrt(var + eps) * g + b

    xq = ln(x_q, mod.q_gamma, mod.q_beta, mod.ln_eps)
    xkv = ln(x_kv, mod.kv_gamma, mod.kv_beta, mod.ln_eps)

    B, N, _ = xq.shape
    M = xkv.shape[1]
    H, d = mod.heads, mod.head_dim

    q = xq @ mod.w_q
    k = xkv @ mod.w_k
    v = xkv @ mod.w_v

    def split(t, seq):
        return t.reshape(B, seq, H, d).transpose(0, 2, 1, 3)   # (B, H, seq, d)

    qh, kh, vh = split(q, N), split(k, M), split(v, M)
    sim = jnp.einsum('bhid,bhjd->bhij', qh, kh) * mod.scale
    attn = jax.nn.softmax(sim, axis=-1)
    out = jnp.einsum('bhij,bhjd->bhid', attn, vh)
    out = out.transpose(0, 2, 1, 3).reshape(B, N, H * d)
    return out @ mod.w_out + mod.b_out


# ---------------------------------------------------------------------- main

if __name__ == "__main__":
    key = jax.random.PRNGKey(0)
    k_xq, k_xkv, k_params = jax.random.split(key, 3)

    # Small but TPU-tile-friendly shapes; M != N exercises true cross-attention.
    B, N, M = 2, 128, 256
    q_dim, kv_dim = 128, 64
    heads, head_dim = 4, 128

    x_q = jax.random.normal(k_xq, (B, N, q_dim), jnp.float32)
    x_kv = jax.random.normal(k_xkv, (B, M, kv_dim), jnp.float32)

    mod = CrossAttentionPallas(q_dim=q_dim, kv_dim=kv_dim, num_heads=heads,
                               head_dim=head_dim, dropout=0.0, key=k_params)

    out = jax.block_until_ready(mod(x_q, x_kv))
    assert out.shape == (B, N, q_dim), out.shape

    ref = reference_forward(mod, x_q, x_kv)
    rel = float(jnp.linalg.norm(out - ref) / jnp.linalg.norm(ref))
    max_abs = float(jnp.max(jnp.abs(out - ref)))
    assert rel < 3e-2, (rel, max_abs)   # bf16 MXU/activation pipeline vs f32 ref

    print("KERNEL_OK")
</pallas_src>

<mosaic_0001>
module attributes {stable_mosaic.version = 11 : i64} {
  func.func @_ln_matmul_kernel(%arg0: i32, %arg1: i32, %arg2: memref<128x128xf32, #tpu.memory_space<vmem>>, %arg3: memref<128x512xbf16, #tpu.memory_space<vmem>>, %arg4: memref<1x512xf32, #tpu.memory_space<vmem>>, %arg5: memref<128x512xbf16, #tpu.memory_space<vmem>>) attributes {dimension_semantics = [#tpu.dimension_semantics<parallel>, #tpu.dimension_semantics<parallel>], iteration_bounds = array<i64: 2, 1>, scalar_prefetch = 0 : i64, scratch_operands = 0 : i64, tpu.core_type = #tpu.core_type<tc>, window_params = [{transform_indices = @transform_0, window_bounds = array<i64: 128, 128>}, {transform_indices = @transform_1, window_bounds = array<i64: 128, 512>}, {transform_indices = @transform_2, window_bounds = array<i64: 1, 512>}, {transform_indices = @transform_3, window_bounds = array<i64: 128, 512>}]} {
    %c0 = arith.constant 0 : index
    %c0_0 = arith.constant 0 : index
    %0 = vector.load %arg2[%c0, %c0_0] : memref<128x128xf32, #tpu.memory_space<vmem>>, vector<128x128xf32>
    %cst = arith.constant dense<0.000000e+00> : vector<128xf32>
    %1 = vector.multi_reduction <add>, %0, %cst [1] : vector<128x128xf32> to vector<128xf32>
    %2 = vector.shape_cast %1 : vector<128xf32> to vector<128x1xf32>
    %cst_1 = arith.constant 1.280000e+02 : f32
    %3 = vector.broadcast %cst_1 : f32 to vector<128x1xf32>
    %4 = arith.divf %2, %3 : vector<128x1xf32>
    %5 = vector.broadcast %4 : vector<128x1xf32> to vector<128x128xf32>
    %6 = arith.subf %0, %5 : vector<128x128xf32>
    %7 = arith.mulf %6, %6 : vector<128x128xf32>
    %cst_2 = arith.constant dense<0.000000e+00> : vector<128xf32>
    %8 = vector.multi_reduction <add>, %7, %cst_2 [1] : vector<128x128xf32> to vector<128xf32>
    %9 = vector.shape_cast %8 : vector<128xf32> to vector<128x1xf32>
    %cst_3 = arith.constant 1.280000e+02 : f32
    %10 = vector.broadcast %cst_3 : f32 to vector<128x1xf32>
    %11 = arith.divf %9, %10 : vector<128x1xf32>
    %cst_4 = arith.constant 9.99999974E-6 : f32
    %12 = vector.broadcast %cst_4 : f32 to vector<128x1xf32>
    %13 = arith.addf %11, %12 : vector<128x1xf32>
    %14 = math.rsqrt %13 : vector<128x1xf32>
    %15 = vector.broadcast %14 : vector<128x1xf32> to vector<128x128xf32>
    %16 = arith.mulf %6, %15 : vector<128x128xf32>
    %17 = arith.truncf %16 : vector<128x128xf32> to vector<128x128xbf16>
    %c0_5 = arith.constant 0 : index
    %c0_6 = arith.constant 0 : index
    %18 = vector.load %arg3[%c0_5, %c0_6] : memref<128x512xbf16, #tpu.memory_space<vmem>>, vector<128x512xbf16>
    %cst_7 = arith.constant dense<0.000000e+00> : vector<128x512xf32>
    %19 = tpu.matmul %17, %18, %cst_7 {dimension_numbers = #tpu.dot_dimension_numbers<[1], [0], [0], [1], [0, 0, 1, 1], [], []>} : vector<128x128xbf16>, vector<128x512xbf16>, vector<128x512xf32> -> vector<128x512xf32>
    %c0_8 = arith.constant 0 : index
    %c0_9 = arith.constant 0 : index
    %20 = vector.load %arg4[%c0_8, %c0_9] : memref<1x512xf32, #tpu.memory_space<vmem>>, vector<1x512xf32>
    %21 = vector.broadcast %20 : vector<1x512xf32> to vector<128x512xf32>
    %22 = arith.addf %19, %21 : vector<128x512xf32>
    %23 = arith.truncf %22 : vector<128x512xf32> to vector<128x512xbf16>
    %c0_10 = arith.constant 0 : index
    %c0_11 = arith.constant 0 : index
    %24 = vector.load %arg5[%c0_10, %c0_11] : memref<128x512xbf16, #tpu.memory_space<vmem>>, vector<128x512xbf16>
    tpu.vector_store %arg5[%c0_10, %c0_11], %23 {strides = array<i32>} : memref<128x512xbf16, #tpu.memory_space<vmem>>, vector<128x512xbf16>,
    return
  }
  func.func @transform_0(%arg0: i32, %arg1: i32) -> (i32, i32) {
    %c0_i32 = arith.constant 0 : i32
    %c0_i32_0 = arith.constant 0 : i32
    return %arg0, %c0_i32 : i32, i32
  }
  func.func @transform_1(%arg0: i32, %arg1: i32) -> (i32, i32) {
    %c0_i32 = arith.constant 0 : i32
    %c0_i32_0 = arith.constant 0 : i32
    return %c0_i32, %arg1 : i32, i32
  }
  func.func @transform_2(%arg0: i32, %arg1: i32) -> (i32, i32) {
    %c0_i32 = arith.constant 0 : i32
    %c0_i32_0 = arith.constant 0 : i32
    return %c0_i32, %arg1 : i32, i32
  }
  func.func @transform_3(%arg0: i32, %arg1: i32) -> (i32, i32) {
    %c0_i32 = arith.constant 0 : i32
    return %arg0, %arg1 : i32, i32
  }
}

</mosaic_0001>

<llo_original>
// kernel: tpu_custom_call.1
$region0: #{tpu_custom_call.1}
  #allocation0 [shape = 'u32[]', space=smem, size = 0x4, offset = 0x4, fixed_abs, tag = 'smem constant byte address 0x4 - core index']
  #allocation1 [shape = 'u32[144,128]{1,0:T(1,128)}', space=vmem, size = 0x12000, scoped, tag = 'internal scratch']
  %s0 = inlined_call_operand.hbm [shape: f32[256,128], index: 0, kind: input, shape index: {}]
  %s1 = inlined_call_operand.hbm [shape: bf16[128,512], index: 1, kind: input, shape index: {}]
  %s2 = inlined_call_operand.hbm [shape: f32[1,512], index: 2, kind: input, shape index: {}]
  %s3 = inlined_call_operand.hbm [shape: bf16[256,512], index: 3, kind: output, shape index: {}]
  %s4 = sld [smem:[#allocation0]]
  $region57: #{tpu_custom_call.1} parent=0
    _
  %s6 = ssub.s32 1, %s4
  %s7 = scalar_select 0, %s6, %s4
  $region1: #{tpu_custom_call.1} parent=0
    #allocation2 [shape = 'u8[131072]{0}', space=vmem, size = 0x20000, scoped, tag = 'input window, operand 0']
    #allocation3 [shape = 's32[2]{0}', space=sflag, size = 0x8, scoped, tag = 'scoped memory for tpu_custom_call.1']
    #allocation4 [shape = 's32[2]{0}', space=sflag, size = 0x8, scoped, tag = 'scoped memory for tpu_custom_call.1']
    #allocation5 [shape = 'u8[131072]{0}', space=vmem, size = 0x20000, scoped, tag = 'input window, operand 1, single buffered']
    #allocation6 [shape = 's32[1]{0}', space=sflag, size = 0x4, scoped, tag = 'scoped memory for tpu_custom_call.1']
    #allocation7 [shape = 'u8[2048]{0}', space=vmem, size = 0x800, scoped, tag = 'input window, operand 2, single buffered']
    #allocation8 [shape = 'u8[262144]{0}', space=vmem, size = 0x40000, scoped, tag = 'output window, operand 0']
    %8 = vsyncpa [#allocation3], 0
    %s9 = scalar_lea.sflag [#allocation3], 1
    %10 = vsyncpa %s9, 0
    %11 = vsyncpa [#allocation6], 0
    %12 = vsyncpa [#allocation4], 0
    %s13 = scalar_lea.sflag [#allocation4], 1
    %14 = vsyncpa %s13, 0
    loop: start=0, step=1, limit=4
    $region2: #{tpu_custom_call.1} parent=1 // loop_pre_header
      _
    $region3: #{tpu_custom_call.1} parent=1 // loop_header
      %s16 = sphi 0, %s20
      %p17 = scmp.ge.s32.totalorder %s16, 4
      %s23 = sphi 0, %s35
      %s24 = sphi 0, %s31
      %s25 = sphi 0, %s23
      %s26 = sphi 0, %s24
      %s27 = sphi 0, %s25
      %s28 = sphi 0, %s26
      %s38 = sphi 0, %s40
      %s41 = sphi 0, %s38
      %s42 = sphi 0, %s41
      %s58 = sphi 0, %s42
      %s64 = sphi 0, %s66
      %s67 = sphi 0, %s64
      %s68 = sphi 0, %s67
      %s84 = sphi 0, %s68
      %s90 = sphi 0, %s92
      %s93 = sphi 0, %s90
      %s94 = sphi 0, %s93
      %s110 = sphi 0, %s94
      %s118 = sphi 0, %s120
      %s121 = sphi 0, %s118
      %s122 = sphi 0, %s121
      %s138 = sphi 0, %s122
    $region4: #{tpu_custom_call.1} parent=1 // loop_header_branch
      %19 = sbr.rel (%p17) target = $region8
    $region5: #{tpu_custom_call.1} parent=1 // loop_body
      %s21 = ssub.s32 %s16, 1
      %s22 = ssub.s32 %s16, 2
      %s29 = sadd.s32 1, %s24
      %p30 = scmp.ge.s32.totalorder %s29, 1
      %s31 = scalar_select %p30, 0, %s29
      %s32 = sadd.s32 1, %s23
      %s33 = scalar_select %p30, %s32, %s23
      %p34 = scmp.ge.s32.totalorder %s33, 2
      %s35 = scalar_select %p34, 0, %s33
      %s36 = ssub.s32 %s23, %s35
      %p37 = scmp.eq.s32.totalorder %s36, 0
      %s39 = sadd.s32 %s38, 1
      %s40 = scalar_select %p37, %s38, %s39
      %p43 = pneg %p37
      %p44 = scmp.eq.s32.totalorder %s16, 1
      %p45 = por %p43, %p44
      %p46 = scmp.ne.s32.totalorder %s38, %s41
      %p47 = scmp.eq.s32.totalorder %s16, 0
      %p48 = por %p46, %p47
      %p49 = scmp.ne.s32.totalorder %s38, %s41
      %p50 = scmp.eq.s32.totalorder %s21, 1
      %p51 = por %p49, %p50
      %p52 = scmp.ne.s32.totalorder %s41, %s42
      %p53 = scmp.eq.s32.totalorder %s21, 0
      %p54 = por %p52, %p53
      %p55 = scmp.ne.s32.totalorder %s41, %s42
      %p56 = scmp.eq.s32.totalorder %s22, 1
      %p57 = por %p55, %p56
      %p59 = scmp.ne.s32.totalorder %s42, %s58
      %p60 = scmp.eq.s32.totalorder %s22, 0
      %p61 = por %p59, %p60
      %s62 = ssub.s32 %s24, %s31
      %p63 = scmp.eq.s32.totalorder %s62, 0
      %s65 = sadd.s32 %s64, 1
      %s66 = scalar_select %p63, %s64, %s65
      %p69 = pneg %p63
      %p70 = scmp.eq.s32.totalorder %s16, 1
      %p71 = por %p69, %p70
      %p72 = scmp.ne.s32.totalorder %s64, %s67
      %p73 = scmp.eq.s32.totalorder %s16, 0
      %p74 = por %p72, %p73
      %p75 = scmp.ne.s32.totalorder %s64, %s67
      %p76 = scmp.eq.s32.totalorder %s21, 1
      %p77 = por %p75, %p76
      %p78 = scmp.ne.s32.totalorder %s67, %s68
      %p79 = scmp.eq.s32.totalorder %s21, 0
      %p80 = por %p78, %p79
      %p81 = scmp.ne.s32.totalorder %s67, %s68
      %p82 = scmp.eq.s32.totalorder %s22, 1
      %p83 = por %p81, %p82
      %p85 = scmp.ne.s32.totalorder %s68, %s84
      %p86 = scmp.eq.s32.totalorder %s22, 0
      %p87 = por %p85, %p86
      %s88 = ssub.s32 %s24, %s31
      %p89 = scmp.eq.s32.totalorder %s88, 0
      %s91 = sadd.s32 %s90, 1
      %s92 = scalar_select %p89, %s90, %s91
      %p95 = pneg %p89
      %p96 = scmp.eq.s32.totalorder %s16, 1
      %p97 = por %p95, %p96
      %p98 = scmp.ne.s32.totalorder %s90, %s93
      %p99 = scmp.eq.s32.totalorder %s16, 0
      %p100 = por %p98, %p99
      %p101 = scmp.ne.s32.totalorder %s90, %s93
      %p102 = scmp.eq.s32.totalorder %s21, 1
      %p103 = por %p101, %p102
      %p104 = scmp.ne.s32.totalorder %s93, %s94
      %p105 = scmp.eq.s32.totalorder %s21, 0
      %p106 = por %p104, %p105
      %p107 = scmp.ne.s32.totalorder %s93, %s94
      %p108 = scmp.eq.s32.totalorder %s22, 1
      %p109 = por %p107, %p108
      %p111 = scmp.ne.s32.totalorder %s94, %s110
      %p112 = scmp.eq.s32.totalorder %s22, 0
      %p113 = por %p111, %p112
      %s114 = ssub.s32 %s23, %s35
      %s115 = ssub.s32 %s24, %s31
      %s116 = sor.u32 %s114, %s115
      %p117 = scmp.eq.s32.totalorder %s116, 0
      %s119 = sadd.s32 %s118, 1
      %s120 = scalar_select %p117, %s118, %s119
      %p123 = pneg %p117
      %p124 = scmp.eq.s32.totalorder %s16, 1
      %p125 = por %p123, %p124
      %p126 = scmp.ne.s32.totalorder %s118, %s121
      %p127 = scmp.eq.s32.totalorder %s16, 0
      %p128 = por %p126, %p127
      %p129 = scmp.ne.s32.totalorder %s118, %s121
      %p130 = scmp.eq.s32.totalorder %s21, 1
      %p131 = por %p129, %p130
      %p132 = scmp.ne.s32.totalorder %s121, %s122
      %p133 = scmp.eq.s32.totalorder %s21, 0
      %p134 = por %p132, %p133
      %p135 = scmp.ne.s32.totalorder %s121, %s122
      %p136 = scmp.eq.s32.totalorder %s22, 1
      %p137 = por %p135, %p136
      %p139 = scmp.ne.s32.totalorder %s122, %s138
      %p140 = scmp.eq.s32.totalorder %s22, 0
      %p141 = por %p139, %p140
      %p142 = scmp.le.s32.totalorder 1, %s16
      %p143 = scmp.lt.s32.totalorder %s16, 3
      %p144 = pnand %p142, %p143
      %p145 = pneg %p144
      // Predicated region
      $region9: #{tpu_custom_call.1} parent=5 // pred_check
        _
      $region10: #{tpu_custom_call.1} parent=5 // pred_check_branch
        %147 = sbr.rel (%p144) target = $region12
      $region11: #{tpu_custom_call.1} parent=5 // pred_region
        %s148 = ssub.s32 %s16, 1
        // Predicated region
        $region13: #{tpu_custom_call.1} parent=11 // pred_check
          %p149 = pneg %p80
        $region14: #{tpu_custom_call.1} parent=11 // pred_check_branch
          %151 = sbr.rel (%p149) target = $region16
        $region15: #{tpu_custom_call.1} parent=11 // pred_region
          %s152 = smul.u32 4, %s26
          %s154 = ssub.s32 4096, 4096
          %155 = vsyncadd [#allocation6], %s154
          %s156 = smul.addr %s152, 64
          %s157 = scalar_lea.hbm %s1, %s156
          %s158 = sshll.u32 [#allocation5], 4
          %s159 = int_to_ptr.vmem [resolvable:$true] %s158
          %164 = dma.hbm_to_vmem [thread:$0]  %s157, 4096, %s159, [#allocation6], 256, 256, 16
        $region16: #{tpu_custom_call.1} parent=11 // pred_fallthru
          _
        // Predicated region
        $region17: #{tpu_custom_call.1} parent=11 // pred_check
          %p165 = pneg %p106
        $region18: #{tpu_custom_call.1} parent=11 // pred_check_branch
          %167 = sbr.rel (%p165) target = $region20
        $region19: #{tpu_custom_call.1} parent=11 // pred_region
          %s168 = smul.u32 4, %s26
          %s170 = ssub.s32 64, 64
          %171 = vsyncadd [#allocation6], %s170
          %s172 = smul.addr %s168, 16
          %s173 = scalar_lea.hbm %s2, %s172
          %s175 = sshll.u32 [#allocation7], 4
          %s176 = int_to_ptr.vmem [resolvable:$true] %s175
          %178 = dma.hbm_to_vmem [thread:$0]  %s173, 64, %s176, [#allocation6]
        $region20: #{tpu_custom_call.1} parent=11 // pred_fallthru
          _
      $region12: #{tpu_custom_call.1} parent=5 // pred_fallthru
        _
      %p179 = scmp.lt.s32.totalorder %s16, 2
      // Predicated region
      $region21: #{tpu_custom_call.1} parent=5 // pred_check
        %p180 = pneg %p179
      $region22: #{tpu_custom_call.1} parent=5 // pred_check_branch
        %182 = sbr.rel (%p180) target = $region24
      $region23: #{tpu_custom_call.1} parent=5 // pred_region
        // Predicated region
        $region25: #{tpu_custom_call.1} parent=23 // pred_check
          %p183 = pneg %p48
        $region26: #{tpu_custom_call.1} parent=23 // pred_check_branch
          %185 = sbr.rel (%p183) target = $region28
        $region27: #{tpu_custom_call.1} parent=23 // pred_region
          %s186 = sand.u32 %s38, 1
          %s187 = scalar_lea.sflag [#allocation3], %s186
          %s188 = sand.u32 %s38, 1
          %s189 = smul.addr %s188, 128
          %s190 = scalar_lea.vmem [#allocation2], %s189
          %s191 = smul.u32 16, %s23
          %s193 = ssub.s32 2048, 2048
          %194 = vsyncadd %s187, %s193
          %s195 = smul.addr %s191, 128
          %s196 = scalar_lea.hbm %s0, %s195
          %s197 = sshll.u32 %s190, 4
          %s198 = int_to_ptr.vmem [resolvable:$true] %s197
          %203 = dma.hbm_to_vmem [thread:$0]  %s196, 2048, %s198, %s187, 128, 128, 8
        $region28: #{tpu_custom_call.1} parent=23 // pred_fallthru
          _
      $region24: #{tpu_custom_call.1} parent=5 // pred_fallthru
        _
      %p204 = scmp.le.s32.totalorder 1, %s16
      %p205 = scmp.lt.s32.totalorder %s16, 3
      %p206 = pnand %p204, %p205
      %p207 = pneg %p206
      // Predicated region
      $region29: #{tpu_custom_call.1} parent=5 // pred_check
        _
      $region30: #{tpu_custom_call.1} parent=5 // pred_check_branch
        %209 = sbr.rel (%p206) target = $region32
      $region31: #{tpu_custom_call.1} parent=5 // pred_region
        %s210 = ssub.s32 %s16, 1
        %s211 = sand.u32 %s41, 1
        %s212 = scalar_lea.sflag [#allocation3], %s211
        %s213 = sand.u32 %s41, 1
        %s214 = smul.addr %s213, 128
        %s215 = scalar_lea.vmem [#allocation2], %s214
        // Predicated region
        $region33: #{tpu_custom_call.1} parent=31 // pred_check
          %p216 = pneg %p54
        $region34: #{tpu_custom_call.1} parent=31 // pred_check_branch
          %218 = sbr.rel (%p216) target = $region36
        $region35: #{tpu_custom_call.1} parent=31 // pred_region
          %219 = dma.done %s212, 2048
        $region36: #{tpu_custom_call.1} parent=31 // pred_fallthru
          _
        // Predicated region
        $region37: #{tpu_custom_call.1} parent=31 // pred_check
          %p220 = pneg %p80
        $region38: #{tpu_custom_call.1} parent=31 // pred_check_branch
          %222 = sbr.rel (%p220) target = $region40
        $region39: #{tpu_custom_call.1} parent=31 // pred_region
          %223 = dma.done [#allocation6], 4096
        $region40: #{tpu_custom_call.1} parent=31 // pred_fallthru
          _
        // Predicated region
        $region41: #{tpu_custom_call.1} parent=31 // pred_check
          %p224 = pneg %p106
        $region42: #{tpu_custom_call.1} parent=31 // pred_check_branch
          %226 = sbr.rel (%p224) target = $region44
        $region43: #{tpu_custom_call.1} parent=31 // pred_region
          %227 = dma.done [#allocation6], 64
        $region44: #{tpu_custom_call.1} parent=31 // pred_fallthru
          _
        %s228 = sand.u32 %s41, 1
        %s229 = scalar_lea.sflag [#allocation3], %s228
        %s230 = sand.u32 %s41, 1
        %s231 = smul.addr %s230, 128
        %s232 = scalar_lea.vmem [#allocation2], %s231
        %p233 = pneg %p54
        %p234 = pneg %p51
        %p235 = pneg %p80
        %p236 = pneg %p77
        %p237 = pneg %p106
        %p238 = pneg %p103
        %p239 = pneg %p134
        %p240 = pneg %p131
        %s241 = sand.u32 %s121, 1
        %s242 = scalar_lea.sflag [#allocation4], %s241
        %s243 = sand.u32 %s121, 1
        %s244 = smul.addr %s243, 256
        %s245 = scalar_lea.vmem [#allocation8], %s244
        %s246 = smul.u32 16, %s25
        %s247 = smul.u32 4, %s26
        %s248 = smul.u32 4, %s26
        %s249 = smul.u32 16, %s25
        %s250 = smul.u32 4, %s26
        %v252 = vld [vmem:[%s215] sm:$0xff]
        %v253 = vld [vmem:[%s215 + $0x8] sm:$0xff]
        %v254 = vld [vmem:[%s215 + $0x10] sm:$0xff]
        %v255 = vld [vmem:[%s215 + $0x18] sm:$0xff]
        %v256 = vld [vmem:[%s215 + $0x20] sm:$0xff]
        %v257 = vld [vmem:[%s215 + $0x28] sm:$0xff]
        %v258 = vld [vmem:[%s215 + $0x30] sm:$0xff]
        %v259 = vld [vmem:[%s215 + $0x38] sm:$0xff]
        %v260 = vld [vmem:[%s215 + $0x40] sm:$0xff]
        %v261 = vld [vmem:[%s215 + $0x48] sm:$0xff]
        %v262 = vld [vmem:[%s215 + $0x50] sm:$0xff]
        %v263 = vld [vmem:[%s215 + $0x58] sm:$0xff]
        %v264 = vld [vmem:[%s215 + $0x60] sm:$0xff]
        %v265 = vld [vmem:[%s215 + $0x68] sm:$0xff]
        %v266 = vld [vmem:[%s215 + $0x70] sm:$0xff]
        %v267 = vld [vmem:[%s215 + $0x78] sm:$0xff]
        %268 = vadd.xlane.f32.xlu0 %v252
        %v269 = vpop.xlane.xlu0 %268
        %270 = vadd.xlane.f32.xlu0 %v253
        %v271 = vpop.xlane.xlu0 %270
        %272 = vadd.xlane.f32.xlu0 %v254
        %v273 = vpop.xlane.xlu0 %272
        %274 = vadd.xlane.f32.xlu0 %v255
        %v275 = vpop.xlane.xlu0 %274
        %276 = vadd.xlane.f32.xlu0 %v256
        %v277 = vpop.xlane.xlu0 %276
        %278 = vadd.xlane.f32.xlu0 %v257
        %v279 = vpop.xlane.xlu0 %278
        %280 = vadd.xlane.f32.xlu0 %v258
        %v281 = vpop.xlane.xlu0 %280
        %282 = vadd.xlane.f32.xlu0 %v259
        %v283 = vpop.xlane.xlu0 %282
        %284 = vadd.xlane.f32.xlu0 %v260
        %v285 = vpop.xlane.xlu0 %284
        %286 = vadd.xlane.f32.xlu0 %v261
        %v287 = vpop.xlane.xlu0 %286
        %288 = vadd.xlane.f32.xlu0 %v262
        %v289 = vpop.xlane.xlu0 %288
        %290 = vadd.xlane.f32.xlu0 %v263
        %v291 = vpop.xlane.xlu0 %290
        %292 = vadd.xlane.f32.xlu0 %v264
        %v293 = vpop.xlane.xlu0 %292
        %294 = vadd.xlane.f32.xlu0 %v265
        %v295 = vpop.xlane.xlu0 %294
        %296 = vadd.xlane.f32.xlu0 %v266
        %v297 = vpop.xlane.xlu0 %296
        %298 = vadd.xlane.f32.xlu0 %v267
        %v299 = vpop.xlane.xlu0 %298
        %v300 = vrcp.pop 128.0
        %v301 = vmul.f32 %v269, %v300
        %v302 = vmul.f32 %v271, %v300
        %v303 = vmul.f32 %v273, %v300
        %v304 = vmul.f32 %v275, %v300
        %v305 = vmul.f32 %v277, %v300
        %v306 = vmul.f32 %v279, %v300
        %v307 = vmul.f32 %v281, %v300
        %v308 = vmul.f32 %v283, %v300
        %v309 = vmul.f32 %v285, %v300
        %v310 = vmul.f32 %v287, %v300
        %v311 = vmul.f32 %v289, %v300
        %v312 = vmul.f32 %v291, %v300
        %v313 = vmul.f32 %v293, %v300
        %v314 = vmul.f32 %v295, %v300
        %v315 = vmul.f32 %v297, %v300
        %v316 = vmul.f32 %v299, %v300
        %v317 = vsub.f32 %v252, %v301
        %v318 = vsub.f32 %v253, %v302
        %v319 = vsub.f32 %v254, %v303
        %v320 = vsub.f32 %v255, %v304
        %v321 = vsub.f32 %v256, %v305
        %v322 = vsub.f32 %v257, %v306
        %v323 = vsub.f32 %v258, %v307
        %v324 = vsub.f32 %v259, %v308
        %v325 = vsub.f32 %v260, %v309
        %v326 = vsub.f32 %v261, %v310
        %v327 = vsub.f32 %v262, %v311
        %v328 = vsub.f32 %v263, %v312
        %v329 = vsub.f32 %v264, %v313
        %v330 = vsub.f32 %v265, %v314
        %v331 = vsub.f32 %v266, %v315
        %v332 = vsub.f32 %v267, %v316
        %v333 = vmul.f32 %v317, %v317
        %v334 = vmul.f32 %v318, %v318
        %v335 = vmul.f32 %v319, %v319
        %v336 = vmul.f32 %v320, %v320
        %v337 = vmul.f32 %v321, %v321
        %v338 = vmul.f32 %v322, %v322
        %v339 = vmul.f32 %v323, %v323
        %v340 = vmul.f32 %v324, %v324
        %v341 = vmul.f32 %v325, %v325
        %v342 = vmul.f32 %v326, %v326
        %v343 = vmul.f32 %v327, %v327
        %v344 = vmul.f32 %v328, %v328
        %v345 = vmul.f32 %v329, %v329
        %v346 = vmul.f32 %v330, %v330
        %v347 = vmul.f32 %v331, %v331
        %v348 = vmul.f32 %v332, %v332
        %349 = vadd.xlane.f32.xlu0 %v333
        %v350 = vpop.xlane.xlu0 %349
        %351 = vadd.xlane.f32.xlu0 %v334
        %v352 = vpop.xlane.xlu0 %351
        %353 = vadd.xlane.f32.xlu0 %v335
        %v354 = vpop.xlane.xlu0 %353
        %355 = vadd.xlane.f32.xlu0 %v336
        %v356 = vpop.xlane.xlu0 %355
        %357 = vadd.xlane.f32.xlu0 %v337
        %v358 = vpop.xlane.xlu0 %357
        %359 = vadd.xlane.f32.xlu0 %v338
        %v360 = vpop.xlane.xlu0 %359
        %361 = vadd.xlane.f32.xlu0 %v339
        %v362 = vpop.xlane.xlu0 %361
        %363 = vadd.xlane.f32.xlu0 %v340
        %v364 = vpop.xlane.xlu0 %363
        %365 = vadd.xlane.f32.xlu0 %v341
        %v366 = vpop.xlane.xlu0 %365
        %367 = vadd.xlane.f32.xlu0 %v342
        %v368 = vpop.xlane.xlu0 %367
        %369 = vadd.xlane.f32.xlu0 %v343
        %v370 = vpop.xlane.xlu0 %369
        %371 = vadd.xlane.f32.xlu0 %v344
        %v372 = vpop.xlane.xlu0 %371
        %373 = vadd.xlane.f32.xlu0 %v345
        %v374 = vpop.xlane.xlu0 %373
        %375 = vadd.xlane.f32.xlu0 %v346
        %v376 = vpop.xlane.xlu0 %375
        %377 = vadd.xlane.f32.xlu0 %v347
        %v378 = vpop.xlane.xlu0 %377
        %379 = vadd.xlane.f32.xlu0 %v348
        %v380 = vpop.xlane.xlu0 %379
        %v381 = vmul.f32 %v350, %v300
        %v382 = vmul.f32 %v352, %v300
        %v383 = vmul.f32 %v354, %v300
        %v384 = vmul.f32 %v356, %v300
        %v385 = vmul.f32 %v358, %v300
        %v386 = vmul.f32 %v360, %v300
        %v387 = vmul.f32 %v362, %v300
        %v388 = vmul.f32 %v364, %v300
        %v389 = vmul.f32 %v366, %v300
        %v390 = vmul.f32 %v368, %v300
        %v391 = vmul.f32 %v370, %v300
        %v392 = vmul.f32 %v372, %v300
        %v393 = vmul.f32 %v374, %v300
        %v394 = vmul.f32 %v376, %v300
        %v395 = vmul.f32 %v378, %v300
        %v396 = vmul.f32 %v380, %v300
        %v397 = vadd.f32 %v381, 1e-05
        %v398 = vadd.f32 %v382, 1e-05
        %v399 = vadd.f32 %v383, 1e-05
        %v400 = vadd.f32 %v384, 1e-05
        %v401 = vadd.f32 %v385, 1e-05
        %v402 = vadd.f32 %v386, 1e-05
        %v403 = vadd.f32 %v387, 1e-05
        %v404 = vadd.f32 %v388, 1e-05
        %v405 = vadd.f32 %v389, 1e-05
        %v406 = vadd.f32 %v390, 1e-05
        %v407 = vadd.f32 %v391, 1e-05
        %v408 = vadd.f32 %v392, 1e-05
        %v409 = vadd.f32 %v393, 1e-05
        %v410 = vadd.f32 %v394, 1e-05
        %v411 = vadd.f32 %v395, 1e-05
        %v412 = vadd.f32 %v396, 1e-05
        %v413 = vrsqrt.pop %v397
        %v414 = vrsqrt.pop %v398
        %v415 = vrsqrt.pop %v399
        %v416 = vrsqrt.pop %v400
        %v417 = vrsqrt.pop %v401
        %v418 = vrsqrt.pop %v402
        %v419 = vrsqrt.pop %v403
        %v420 = vrsqrt.pop %v404
        %v421 = vrsqrt.pop %v405
        %v422 = vrsqrt.pop %v406
        %v423 = vrsqrt.pop %v407
        %v424 = vrsqrt.pop %v408
        %v425 = vrsqrt.pop %v409
        %v426 = vrsqrt.pop %v410
        %v427 = vrsqrt.pop %v411
        %v428 = vrsqrt.pop %v412
        %v429 = vmul.f32 %v317, %v413
        %v430 = vmul.f32 %v318, %v414
        %v431 = vmul.f32 %v319, %v415
        %v432 = vmul.f32 %v320, %v416
        %v433 = vmul.f32 %v321, %v417
        %v434 = vmul.f32 %v322, %v418
        %v435 = vmul.f32 %v323, %v419
        %v436 = vmul.f32 %v324, %v420
        %v437 = vmul.f32 %v325, %v421
        %v438 = vmul.f32 %v326, %v422
        %v439 = vmul.f32 %v327, %v423
        %v440 = vmul.f32 %v328, %v424
        %v441 = vmul.f32 %v329, %v425
        %v442 = vmul.f32 %v330, %v426
        %v443 = vmul.f32 %v331, %v427
        %v444 = vmul.f32 %v332, %v428
        %v445 = vpack.c.bf16 %v430, %v429
        %v446 = vpack.c.bf16 %v432, %v431
        %v447 = vpack.c.bf16 %v434, %v433
        %v448 = vpack.c.bf16 %v436, %v435
        %v449 = vpack.c.bf16 %v438, %v437
        %v450 = vpack.c.bf16 %v440, %v439
        %v451 = vpack.c.bf16 %v442, %v441
        %v452 = vpack.c.bf16 %v444, %v443
        %v453 = vld [vmem:[#allocation5] sm:$0xff]
        %v454 = vld [vmem:[#allocation5 + $0x8] sm:$0xff]
        %v455 = vld [vmem:[#allocation5 + $0x10] sm:$0xff]
        %v456 = vld [vmem:[#allocation5 + $0x18] sm:$0xff]
        %v457 = vld [vmem:[#allocation5 + $0x20] sm:$0xff]
        %v458 = vld [vmem:[#allocation5 + $0x28] sm:$0xff]
        %v459 = vld [vmem:[#allocation5 + $0x30] sm:$0xff]
        %v460 = vld [vmem:[#allocation5 + $0x38] sm:$0xff]
        %v461 = vld [vmem:[#allocation5 + $0x40] sm:$0xff]
        %v462 = vld [vmem:[#allocation5 + $0x48] sm:$0xff]
        %v463 = vld [vmem:[#allocation5 + $0x50] sm:$0xff]
        %v464 = vld [vmem:[#allocation5 + $0x58] sm:$0xff]
        %v465 = vld [vmem:[#allocation5 + $0x60] sm:$0xff]
        %v466 = vld [vmem:[#allocation5 + $0x68] sm:$0xff]
        %v467 = vld [vmem:[#allocation5 + $0x70] sm:$0xff]
        %v468 = vld [vmem:[#allocation5 + $0x78] sm:$0xff]
        %v469 = vld [vmem:[#allocation5 + $0x80] sm:$0xff]
        %v470 = vld [vmem:[#allocation5 + $0x88] sm:$0xff]
        %v471 = vld [vmem:[#allocation5 + $0x90] sm:$0xff]
        %v472 = vld [vmem:[#allocation5 + $0x98] sm:$0xff]
        %v473 = vld [vmem:[#allocation5 + $0xa0] sm:$0xff]
        %v474 = vld [vmem:[#allocation5 + $0xa8] sm:$0xff]
        %v475 = vld [vmem:[#allocation5 + $0xb0] sm:$0xff]
        %v476 = vld [vmem:[#allocation5 + $0xb8] sm:$0xff]
        %v477 = vld [vmem:[#allocation5 + $0xc0] sm:$0xff]
        %v478 = vld [vmem:[#allocation5 + $0xc8] sm:$0xff]
        %v479 = vld [vmem:[#allocation5 + $0xd0] sm:$0xff]
        %v480 = vld [vmem:[#allocation5 + $0xd8] sm:$0xff]
        %v481 = vld [vmem:[#allocation5 + $0xe0] sm:$0xff]
        %v482 = vld [vmem:[#allocation5 + $0xe8] sm:$0xff]
        %v483 = vld [vmem:[#allocation5 + $0xf0] sm:$0xff]
        %v484 = vld [vmem:[#allocation5 + $0xf8] sm:$0xff]
        %v485 = vld [vmem:[#allocation7] sm:$0xf]
        %v487 = vlaneseq
        %v488 = vshrl.u32 %v487, 7
        %v489 = vsub.s32 0, %v488
        %v490 = vrot.slane %v485, %v489
        %v491 = vlaneseq
        %v492 = vshrl.u32 %v491, 7
        %v493 = vsub.s32 1, %v492
        %v494 = vrot.slane %v485, %v493
        %v495 = vlaneseq
        %v496 = vshrl.u32 %v495, 7
        %v497 = vsub.s32 2, %v496
        %v498 = vrot.slane %v485, %v497
        %v499 = vlaneseq
        %v500 = vshrl.u32 %v499, 7
        %v501 = vsub.s32 3, %v500
        %v502 = vrot.slane %v485, %v501
        %v539 = vunpack.c.l.b16 %v453
        %v540 = vunpack.c.h.b16 %v453
        %v541 = vunpack.c.l.b16 %v454
        %v542 = vunpack.c.h.b16 %v454
        %v543 = vunpack.c.l.b16 %v455
        %v544 = vunpack.c.h.b16 %v455
        %v545 = vunpack.c.l.b16 %v456
        %v546 = vunpack.c.h.b16 %v456
        %v547 = vunpack.c.l.b16 %v457
        %v548 = vunpack.c.h.b16 %v457
        %v549 = vunpack.c.l.b16 %v458
        %v550 = vunpack.c.h.b16 %v458
        %v551 = vunpack.c.l.b16 %v459
        %v552 = vunpack.c.h.b16 %v459
        %v553 = vunpack.c.l.b16 %v460
        %v554 = vunpack.c.h.b16 %v460
        %v555 = vunpack.c.l.b16 %v461
        %v556 = vunpack.c.h.b16 %v461
        %v557 = vunpack.c.l.b16 %v462
        %v558 = vunpack.c.h.b16 %v462
        %v559 = vunpack.c.l.b16 %v463
        %v560 = vunpack.c.h.b16 %v463
        %v561 = vunpack.c.l.b16 %v464
        %v562 = vunpack.c.h.b16 %v464
        %v563 = vunpack.c.l.b16 %v465
        %v564 = vunpack.c.h.b16 %v465
        %v565 = vunpack.c.l.b16 %v466
        %v566 = vunpack.c.h.b16 %v466
        %v567 = vunpack.c.l.b16 %v467
        %v568 = vunpack.c.h.b16 %v467
        %v569 = vunpack.c.l.b16 %v468
        %v570 = vunpack.c.h.b16 %v468
        %v571 = vunpack.c.l.b16 %v469
        %v572 = vunpack.c.h.b16 %v469
        %v573 = vunpack.c.l.b16 %v470
        %v574 = vunpack.c.h.b16 %v470
        %v575 = vunpack.c.l.b16 %v471
        %v576 = vunpack.c.h.b16 %v471
        %v577 = vunpack.c.l.b16 %v472
        %v578 = vunpack.c.h.b16 %v472
        %v579 = vunpack.c.l.b16 %v473
        %v580 = vunpack.c.h.b16 %v473
        %v581 = vunpack.c.l.b16 %v474
        %v582 = vunpack.c.h.b16 %v474
        %v583 = vunpack.c.l.b16 %v475
        %v584 = vunpack.c.h.b16 %v475
        %v585 = vunpack.c.l.b16 %v476
        %v586 = vunpack.c.h.b16 %v476
        %v587 = vunpack.c.l.b16 %v477
        %v588 = vunpack.c.h.b16 %v477
        %v589 = vunpack.c.l.b16 %v478
        %v590 = vunpack.c.h.b16 %v478
        %v591 = vunpack.c.l.b16 %v479
        %v592 = vunpack.c.h.b16 %v479
        %v593 = vunpack.c.l.b16 %v480
        %v594 = vunpack.c.h.b16 %v480
        %v595 = vunpack.c.l.b16 %v481
        %v596 = vunpack.c.h.b16 %v481
        %v597 = vunpack.c.l.b16 %v482
        %v598 = vunpack.c.h.b16 %v482
        %v599 = vunpack.c.l.b16 %v483
        %v600 = vunpack.c.h.b16 %v483
        %v601 = vunpack.c.l.b16 %v484
        %v602 = vunpack.c.h.b16 %v484
        %v603 = vpack.c.b16 %v543, %v539
        %v604 = vpack.c.b16 %v544, %v540
        %v605 = vpack.c.b16 %v545, %v541
        %v606 = vpack.c.b16 %v546, %v542
        %v607 = vpack.c.b16 %v551, %v547
        %v608 = vpack.c.b16 %v552, %v548
        %v609 = vpack.c.b16 %v553, %v549
        %v610 = vpack.c.b16 %v554, %v550
        %v611 = vpack.c.b16 %v559, %v555
        %v612 = vpack.c.b16 %v560, %v556
        %v613 = vpack.c.b16 %v561, %v557
        %v614 = vpack.c.b16 %v562, %v558
        %v615 = vpack.c.b16 %v567, %v563
        %v616 = vpack.c.b16 %v568, %v564
        %v617 = vpack.c.b16 %v569, %v565
        %v618 = vpack.c.b16 %v570, %v566
        %v619 = vpack.c.b16 %v575, %v571
        %v620 = vpack.c.b16 %v576, %v572
        %v621 = vpack.c.b16 %v577, %v573
        %v622 = vpack.c.b16 %v578, %v574
        %v623 = vpack.c.b16 %v583, %v579
        %v624 = vpack.c.b16 %v584, %v580
        %v625 = vpack.c.b16 %v585, %v581
        %v626 = vpack.c.b16 %v586, %v582
        %v627 = vpack.c.b16 %v591, %v587
        %v628 = vpack.c.b16 %v592, %v588
        %v629 = vpack.c.b16 %v593, %v589
        %v630 = vpack.c.b16 %v594, %v590
        %v631 = vpack.c.b16 %v599, %v595
        %v632 = vpack.c.b16 %v600, %v596
        %v633 = vpack.c.b16 %v601, %v597
        %v634 = vpack.c.b16 %v602, %v598
        %667 = vmatprep.subr.bf16.mxu0 %v632
        %668 = vmatpush1.bf16.msra.mxu0 %v631
        %669 = vmatprep.subr.bf16.mxu0 %v628
        %670 = vmatpush1.bf16.msra.mxu0 %v627
        %671 = vmatprep.subr.bf16.mxu0 %v624
        %672 = vmatpush1.bf16.msra.mxu0 %v623
        %673 = vmatprep.subr.bf16.mxu0 %v620
        %674 = vmatpush1.bf16.msra.mxu0 %v619
        %675 = vmatprep.subr.bf16.mxu0 %v616
        %676 = vmatpush1.bf16.msra.mxu0 %v615
        %677 = vmatprep.subr.bf16.mxu0 %v612
        %678 = vmatpush1.bf16.msra.mxu0 %v611
        %679 = vmatprep.subr.bf16.mxu0 %v608
        %680 = vmatpush1.bf16.msra.mxu0 %v607
        %681 = vmatprep.subr.bf16.mxu0 %v604
        %682 = vmatpush1.bf16.msra.mxu0 %v603
        %683 = vmatprep.subr.bf16.mxu0 0
        %684 = vmatpush2.bf16.msra.mxu0 0
        %685 = vmatprep.subr.bf16.mxu0 0
        %686 = vmatpush2.bf16.msra.mxu0 0
        %687 = vmatprep.subr.bf16.mxu0 0
        %688 = vmatpush2.bf16.msra.mxu0 0
        %689 = vmatprep.subr.bf16.mxu0 0
        %690 = vmatpush2.bf16.msra.mxu0 0
        %691 = vmatprep.subr.bf16.mxu0 0
        %692 = vmatpush2.bf16.msra.mxu0 0
        %693 = vmatprep.subr.bf16.mxu0 0
        %694 = vmatpush2.bf16.msra.mxu0 0
        %695 = vmatprep.subr.bf16.mxu0 0
        %696 = vmatpush2.bf16.msra.mxu0 0
        %697 = vmatprep.subr.bf16.mxu0 0
        %698 = vmatpush2.bf16.msra.mxu0 0
        %699 = vmatprep.mubr.bf16.mxu0 0
        %700 = vmatmul.mubr.bf16.gmra.mxu0 %v445
        %v701 = vpop.f32.mrf.mxu0
        %v702 = vadd.f32 %v490, %v701
        %v703 = vpop.f32.mrf.mxu0
        %v704 = vadd.f32 %v494, %v703
        %v705 = vpop.f32.mrf.mxu0
        %v706 = vadd.f32 %v490, %v705
        %v707 = vpop.f32.mrf.mxu0
        %v708 = vadd.f32 %v494, %v707
        %709 = vmatprep.mubr.bf16.mxu0 0
        %710 = vmatmul.mubr.bf16.gmra.mxu0 %v446
        %v711 = vpop.f32.mrf.mxu0
        %v712 = vadd.f32 %v490, %v711
        %v713 = vpop.f32.mrf.mxu0
        %v714 = vadd.f32 %v494, %v713
        %v715 = vpop.f32.mrf.mxu0
        %v716 = vadd.f32 %v490, %v715
        %v717 = vpop.f32.mrf.mxu0
        %v718 = vadd.f32 %v494, %v717
        %719 = vmatprep.mubr.bf16.mxu0 0
        %720 = vmatmul.mubr.bf16.gmra.mxu0 %v447
        %v721 = vpop.f32.mrf.mxu0
        %v722 = vadd.f32 %v490, %v721
        %v723 = vpop.f32.mrf.mxu0
        %v724 = vadd.f32 %v494, %v723
        %v725 = vpop.f32.mrf.mxu0
        %v726 = vadd.f32 %v490, %v725
        %v727 = vpop.f32.mrf.mxu0
        %v728 = vadd.f32 %v494, %v727
        %729 = vmatprep.mubr.bf16.mxu0 0
        %730 = vmatmul.mubr.bf16.gmra.mxu0 %v448
        %v731 = vpop.f32.mrf.mxu0
        %v732 = vadd.f32 %v490, %v731
        %v733 = vpop.f32.mrf.mxu0
        %v734 = vadd.f32 %v494, %v733
        %v735 = vpop.f32.mrf.mxu0
        %v736 = vadd.f32 %v490, %v735
        %v737 = vpop.f32.mrf.mxu0
        %v738 = vadd.f32 %v494, %v737
        %739 = vmatprep.mubr.bf16.mxu0 0
        %740 = vmatmul.mubr.bf16.gmra.mxu0 %v449
        %v741 = vpop.f32.mrf.mxu0
        %v742 = vadd.f32 %v490, %v741
        %v743 = vpop.f32.mrf.mxu0
        %v744 = vadd.f32 %v494, %v743
        %v745 = vpop.f32.mrf.mxu0
        %v746 = vadd.f32 %v490, %v745
        %v747 = vpop.f32.mrf.mxu0
        %v748 = vadd.f32 %v494, %v747
        %749 = vmatprep.mubr.bf16.mxu0 0
        %750 = vmatmul.mubr.bf16.gmra.mxu0 %v450
        %v751 = vpop.f32.mrf.mxu0
        %v752 = vadd.f32 %v490, %v751
        %v753 = vpop.f32.mrf.mxu0
        %v754 = vadd.f32 %v494, %v753
        %v755 = vpop.f32.mrf.mxu0
        %v756 = vadd.f32 %v490, %v755
        %v757 = vpop.f32.mrf.mxu0
        %v758 = vadd.f32 %v494, %v757
        %759 = vmatprep.mubr.bf16.mxu0 0
        %760 = vmatmul.mubr.bf16.gmra.mxu0 %v451
        %v761 = vpop.f32.mrf.mxu0
        %v762 = vadd.f32 %v490, %v761
        %v763 = vpop.f32.mrf.mxu0
        %v764 = vadd.f32 %v494, %v763
        %v765 = vpop.f32.mrf.mxu0
        %v766 = vadd.f32 %v490, %v765
        %v767 = vpop.f32.mrf.mxu0
        %v768 = vadd.f32 %v494, %v767
        %769 = vmatprep.mubr.bf16.mxu0 0
        %770 = vmatmul.mubr.bf16.gmra.mxu0 %v452
        %v771 = vpop.f32.mrf.mxu0
        %v772 = vadd.f32 %v490, %v771
        %v773 = vpop.f32.mrf.mxu0
        %v774 = vadd.f32 %v494, %v773
        %v775 = vpop.f32.mrf.mxu0
        %v776 = vadd.f32 %v490, %v775
        %v777 = vpop.f32.mrf.mxu0
        %v778 = vadd.f32 %v494, %v777
        %779 = vdwg.mxu0
        %780 = vmatprep.subr.bf16.mxu0 %v634
        %781 = vmatpush1.bf16.msra.mxu0 %v633
        %782 = vmatprep.subr.bf16.mxu0 %v630
        %783 = vmatpush1.bf16.msra.mxu0 %v629
        %784 = vmatprep.subr.bf16.mxu0 %v626
        %785 = vmatpush1.bf16.msra.mxu0 %v625
        %786 = vmatprep.subr.bf16.mxu0 %v622
        %787 = vmatpush1.bf16.msra.mxu0 %v621
        %788 = vmatprep.subr.bf16.mxu0 %v618
        %789 = vmatpush1.bf16.msra.mxu0 %v617
        %790 = vmatprep.subr.bf16.mxu0 %v614
        %791 = vmatpush1.bf16.msra.mxu0 %v613
        %792 = vmatprep.subr.bf16.mxu0 %v610
        %793 = vmatpush1.bf16.msra.mxu0 %v609
        %794 = vmatprep.subr.bf16.mxu0 %v606
        %795 = vmatpush1.bf16.msra.mxu0 %v605
        %796 = vmatprep.subr.bf16.mxu0 0
        %797 = vmatpush2.bf16.msra.mxu0 0
        %798 = vmatprep.subr.bf16.mxu0 0
        %799 = vmatpush2.bf16.msra.mxu0 0
        %800 = vmatprep.subr.bf16.mxu0 0
        %801 = vmatpush2.bf16.msra.mxu0 0
        %802 = vmatprep.subr.bf16.mxu0 0
        %803 = vmatpush2.bf16.msra.mxu0 0
        %804 = vmatprep.subr.bf16.mxu0 0
        %805 = vmatpush2.bf16.msra.mxu0 0
        %806 = vmatprep.subr.bf16.mxu0 0
        %807 = vmatpush2.bf16.msra.mxu0 0
        %808 = vmatprep.subr.bf16.mxu0 0
        %809 = vmatpush2.bf16.msra.mxu0 0
        %810 = vmatprep.subr.bf16.mxu0 0
        %811 = vmatpush2.bf16.msra.mxu0 0
        %812 = vmatprep.mubr.bf16.mxu0 0
        %813 = vmatmul.mubr.bf16.gmra.mxu0 %v445
        %v814 = vpop.f32.mrf.mxu0
        %v815 = vadd.f32 %v498, %v814
        %v816 = vpop.f32.mrf.mxu0
        %v817 = vadd.f32 %v502, %v816
        %v818 = vpop.f32.mrf.mxu0
        %v819 = vadd.f32 %v498, %v818
        %v820 = vpop.f32.mrf.mxu0
        %v821 = vadd.f32 %v502, %v820
        %822 = vmatprep.mubr.bf16.mxu0 0
        %823 = vmatmul.mubr.bf16.gmra.mxu0 %v446
        %v824 = vpop.f32.mrf.mxu0
        %v825 = vadd.f32 %v498, %v824
        %v826 = vpop.f32.mrf.mxu0
        %v827 = vadd.f32 %v502, %v826
        %v828 = vpop.f32.mrf.mxu0
        %v829 = vadd.f32 %v498, %v828
        %v830 = vpop.f32.mrf.mxu0
        %v831 = vadd.f32 %v502, %v830
        %832 = vmatprep.mubr.bf16.mxu0 0
        %833 = vmatmul.mubr.bf16.gmra.mxu0 %v447
        %v834 = vpop.f32.mrf.mxu0
        %v835 = vadd.f32 %v498, %v834
        %v836 = vpop.f32.mrf.mxu0
        %v837 = vadd.f32 %v502, %v836
        %v838 = vpop.f32.mrf.mxu0
        %v839 = vadd.f32 %v498, %v838
        %v840 = vpop.f32.mrf.mxu0
        %v841 = vadd.f32 %v502, %v840
        %842 = vmatprep.mubr.bf16.mxu0 0
        %843 = vmatmul.mubr.bf16.gmra.mxu0 %v448
        %v844 = vpop.f32.mrf.mxu0
        %v845 = vadd.f32 %v498, %v844
        %v846 = vpop.f32.mrf.mxu0
        %v847 = vadd.f32 %v502, %v846
        %v848 = vpop.f32.mrf.mxu0
        %v849 = vadd.f32 %v498, %v848
        %v850 = vpop.f32.mrf.mxu0
        %v851 = vadd.f32 %v502, %v850
        %852 = vmatprep.mubr.bf16.mxu0 0
        %853 = vmatmul.mubr.bf16.gmra.mxu0 %v449
        %v854 = vpop.f32.mrf.mxu0
        %v855 = vadd.f32 %v498, %v854
        %v856 = vpop.f32.mrf.mxu0
        %v857 = vadd.f32 %v502, %v856
        %v858 = vpop.f32.mrf.mxu0
        %v859 = vadd.f32 %v498, %v858
        %v860 = vpop.f32.mrf.mxu0
        %v861 = vadd.f32 %v502, %v860
        %862 = vmatprep.mubr.bf16.mxu0 0
        %863 = vmatmul.mubr.bf16.gmra.mxu0 %v450
        %v864 = vpop.f32.mrf.mxu0
        %v865 = vadd.f32 %v498, %v864
        %v866 = vpop.f32.mrf.mxu0
        %v867 = vadd.f32 %v502, %v866
        %v868 = vpop.f32.mrf.mxu0
        %v869 = vadd.f32 %v498, %v868
        %v870 = vpop.f32.mrf.mxu0
        %v871 = vadd.f32 %v502, %v870
        %872 = vmatprep.mubr.bf16.mxu0 0
        %873 = vmatmul.mubr.bf16.gmra.mxu0 %v451
        %v874 = vpop.f32.mrf.mxu0
        %v875 = vadd.f32 %v498, %v874
        %v876 = vpop.f32.mrf.mxu0
        %v877 = vadd.f32 %v502, %v876
        %v878 = vpop.f32.mrf.mxu0
        %v879 = vadd.f32 %v498, %v878
        %v880 = vpop.f32.mrf.mxu0
        %v881 = vadd.f32 %v502, %v880
        %882 = vmatprep.mubr.bf16.mxu0 0
        %883 = vmatmul.mubr.bf16.gmra.mxu0 %v452
        %v884 = vpop.f32.mrf.mxu0
        %v885 = vadd.f32 %v498, %v884
        %v886 = vpop.f32.mrf.mxu0
        %v887 = vadd.f32 %v502, %v886
        %v888 = vpop.f32.mrf.mxu0
        %v889 = vadd.f32 %v498, %v888
        %v890 = vpop.f32.mrf.mxu0
        %v891 = vadd.f32 %v502, %v890
        %892 = vdwg.mxu0
        %v893 = vpack.c.bf16 %v706, %v702
        %v894 = vpack.c.bf16 %v708, %v704
        %v895 = vpack.c.bf16 %v819, %v815
        %v896 = vpack.c.bf16 %v821, %v817
        %v897 = vpack.c.bf16 %v716, %v712
        %v898 = vpack.c.bf16 %v718, %v714
        %v899 = vpack.c.bf16 %v829, %v825
        %v900 = vpack.c.bf16 %v831, %v827
        %v901 = vpack.c.bf16 %v726, %v722
        %v902 = vpack.c.bf16 %v728, %v724
        %v903 = vpack.c.bf16 %v839, %v835
        %v904 = vpack.c.bf16 %v841, %v837
        %v905 = vpack.c.bf16 %v736, %v732
        %v906 = vpack.c.bf16 %v738, %v734
        %v907 = vpack.c.bf16 %v849, %v845
        %v908 = vpack.c.bf16 %v851, %v847
        %v909 = vpack.c.bf16 %v746, %v742
        %v910 = vpack.c.bf16 %v748, %v744
        %v911 = vpack.c.bf16 %v859, %v855
        %v912 = vpack.c.bf16 %v861, %v857
        %v913 = vpack.c.bf16 %v756, %v752
        %v914 = vpack.c.bf16 %v758, %v754
        %v915 = vpack.c.bf16 %v869, %v865
        %v916 = vpack.c.bf16 %v871, %v867
        %v917 = vpack.c.bf16 %v766, %v762
        %v918 = vpack.c.bf16 %v768, %v764
        %v919 = vpack.c.bf16 %v879, %v875
        %v920 = vpack.c.bf16 %v881, %v877
        %v921 = vpack.c.bf16 %v776, %v772
        %v922 = vpack.c.bf16 %v778, %v774
        %v923 = vpack.c.bf16 %v889, %v885
        %v924 = vpack.c.bf16 %v891, %v887
        %v957 = vunpack.c.l.b16 %v893
        %v958 = vunpack.c.l.b16 %v894
        %v959 = vunpack.c.l.b16 %v895
        %v960 = vunpack.c.l.b16 %v896
        %v961 = vunpack.c.h.b16 %v893
        %v962 = vunpack.c.h.b16 %v894
        %v963 = vunpack.c.h.b16 %v895
        %v964 = vunpack.c.h.b16 %v896
        %v965 = vunpack.c.l.b16 %v897
        %v966 = vunpack.c.l.b16 %v898
        %v967 = vunpack.c.l.b16 %v899
        %v968 = vunpack.c.l.b16 %v900
        %v969 = vunpack.c.h.b16 %v897
        %v970 = vunpack.c.h.b16 %v898
        %v971 = vunpack.c.h.b16 %v899
        %v972 = vunpack.c.h.b16 %v900
        %v973 = vunpack.c.l.b16 %v901
        %v974 = vunpack.c.l.b16 %v902
        %v975 = vunpack.c.l.b16 %v903
        %v976 = vunpack.c.l.b16 %v904
        %v977 = vunpack.c.h.b16 %v901
        %v978 = vunpack.c.h.b16 %v902
        %v979 = vunpack.c.h.b16 %v903
        %v980 = vunpack.c.h.b16 %v904
        %v981 = vunpack.c.l.b16 %v905
        %v982 = vunpack.c.l.b16 %v906
        %v983 = vunpack.c.l.b16 %v907
        %v984 = vunpack.c.l.b16 %v908
        %v985 = vunpack.c.h.b16 %v905
        %v986 = vunpack.c.h.b16 %v906
        %v987 = vunpack.c.h.b16 %v907
        %v988 = vunpack.c.h.b16 %v908
        %v989 = vunpack.c.l.b16 %v909
        %v990 = vunpack.c.l.b16 %v910
        %v991 = vunpack.c.l.b16 %v911
        %v992 = vunpack.c.l.b16 %v912
        %v993 = vunpack.c.h.b16 %v909
        %v994 = vunpack.c.h.b16 %v910
        %v995 = vunpack.c.h.b16 %v911
        %v996 = vunpack.c.h.b16 %v912
        %v997 = vunpack.c.l.b16 %v913
        %v998 = vunpack.c.l.b16 %v914
        %v999 = vunpack.c.l.b16 %v915
        %v1000 = vunpack.c.l.b16 %v916
        %v1001 = vunpack.c.h.b16 %v913
        %v1002 = vunpack.c.h.b16 %v914
        %v1003 = vunpack.c.h.b16 %v915
        %v1004 = vunpack.c.h.b16 %v916
        %v1005 = vunpack.c.l.b16 %v917
        %v1006 = vunpack.c.l.b16 %v918
        %v1007 = vunpack.c.l.b16 %v919
        %v1008 = vunpack.c.l.b16 %v920
        %v1009 = vunpack.c.h.b16 %v917
        %v1010 = vunpack.c.h.b16 %v918
        %v1011 = vunpack.c.h.b16 %v919
        %v1012 = vunpack.c.h.b16 %v920
        %v1013 = vunpack.c.l.b16 %v921
        %v1014 = vunpack.c.l.b16 %v922
        %v1015 = vunpack.c.l.b16 %v923
        %v1016 = vunpack.c.l.b16 %v924
        %v1017 = vunpack.c.h.b16 %v921
        %v1018 = vunpack.c.h.b16 %v922
        %v1019 = vunpack.c.h.b16 %v923
        %v1020 = vunpack.c.h.b16 %v924
        %v1021 = vpack.c.b16 %v958, %v957
        %v1022 = vpack.c.b16 %v960, %v959
        %v1023 = vpack.c.b16 %v962, %v961
        %v1024 = vpack.c.b16 %v964, %v963
        %v1025 = vpack.c.b16 %v966, %v965
        %v1026 = vpack.c.b16 %v968, %v967
        %v1027 = vpack.c.b16 %v970, %v969
        %v1028 = vpack.c.b16 %v972, %v971
        %v1029 = vpack.c.b16 %v974, %v973
        %v1030 = vpack.c.b16 %v976, %v975
        %v1031 = vpack.c.b16 %v978, %v977
        %v1032 = vpack.c.b16 %v980, %v979
        %v1033 = vpack.c.b16 %v982, %v981
        %v1034 = vpack.c.b16 %v984, %v983
        %v1035 = vpack.c.b16 %v986, %v985
        %v1036 = vpack.c.b16 %v988, %v987
        %v1037 = vpack.c.b16 %v990, %v989
        %v1038 = vpack.c.b16 %v992, %v991
        %v1039 = vpack.c.b16 %v994, %v993
        %v1040 = vpack.c.b16 %v996, %v995
        %v1041 = vpack.c.b16 %v998, %v997
        %v1042 = vpack.c.b16 %v1000, %v999
        %v1043 = vpack.c.b16 %v1002, %v1001
        %v1044 = vpack.c.b16 %v1004, %v1003
        %v1045 = vpack.c.b16 %v1006, %v1005
        %v1046 = vpack.c.b16 %v1008, %v1007
        %v1047 = vpack.c.b16 %v1010, %v1009
        %v1048 = vpack.c.b16 %v1012, %v1011
        %v1049 = vpack.c.b16 %v1014, %v1013
        %v1050 = vpack.c.b16 %v1016, %v1015
        %v1051 = vpack.c.b16 %v1018, %v1017
        %v1052 = vpack.c.b16 %v1020, %v1019
        %1085 = vst [vmem:[%s245] sm:$0xff] %v1021
        %1086 = vst [vmem:[%s245 + $0x8] sm:$0xff] %v1022
        %1087 = vst [vmem:[%s245 + $0x10] sm:$0xff] %v1023
        %1088 = vst [vmem:[%s245 + $0x18] sm:$0xff] %v1024
        %1089 = vst [vmem:[%s245 + $0x20] sm:$0xff] %v1025
        %1090 = vst [vmem:[%s245 + $0x28] sm:$0xff] %v1026
        %1091 = vst [vmem:[%s245 + $0x30] sm:$0xff] %v1027
        %1092 = vst [vmem:[%s245 + $0x38] sm:$0xff] %v1028
        %1093 = vst [vmem:[%s245 + $0x40] sm:$0xff] %v1029
        %1094 = vst [vmem:[%s245 + $0x48] sm:$0xff] %v1030
        %1095 = vst [vmem:[%s245 + $0x50] sm:$0xff] %v1031
        %1096 = vst [vmem:[%s245 + $0x58] sm:$0xff] %v1032
        %1097 = vst [vmem:[%s245 + $0x60] sm:$0xff] %v1033
        %1098 = vst [vmem:[%s245 + $0x68] sm:$0xff] %v1034
        %1099 = vst [vmem:[%s245 + $0x70] sm:$0xff] %v1035
        %1100 = vst [vmem:[%s245 + $0x78] sm:$0xff] %v1036
        %1101 = vst [vmem:[%s245 + $0x80] sm:$0xff] %v1037
        %1102 = vst [vmem:[%s245 + $0x88] sm:$0xff] %v1038
        %1103 = vst [vmem:[%s245 + $0x90] sm:$0xff] %v1039
        %1104 = vst [vmem:[%s245 + $0x98] sm:$0xff] %v1040
        %1105 = vst [vmem:[%s245 + $0xa0] sm:$0xff] %v1041
        %1106 = vst [vmem:[%s245 + $0xa8] sm:$0xff] %v1042
        %1107 = vst [vmem:[%s245 + $0xb0] sm:$0xff] %v1043
        %1108 = vst [vmem:[%s245 + $0xb8] sm:$0xff] %v1044
        %1109 = vst [vmem:[%s245 + $0xc0] sm:$0xff] %v1045
        %1110 = vst [vmem:[%s245 + $0xc8] sm:$0xff] %v1046
        %1111 = vst [vmem:[%s245 + $0xd0] sm:$0xff] %v1047
        %1112 = vst [vmem:[%s245 + $0xd8] sm:$0xff] %v1048
        %1113 = vst [vmem:[%s245 + $0xe0] sm:$0xff] %v1049
        %1114 = vst [vmem:[%s245 + $0xe8] sm:$0xff] %v1050
        %1115 = vst [vmem:[%s245 + $0xf0] sm:$0xff] %v1051
        %1116 = vst [vmem:[%s245 + $0xf8] sm:$0xff] %v1052
        %s1117 = sand.u32 %s121, 1
        %s1118 = scalar_lea.sflag [#allocation4], %s1117
        %s1119 = sand.u32 %s121, 1
        %s1120 = smul.addr %s1119, 256
        %s1121 = scalar_lea.vmem [#allocation8], %s1120
        // Predicated region
        $region45: #{tpu_custom_call.1} parent=31 // pred_check
          %p1122 = pneg %p131
        $region46: #{tpu_custom_call.1} parent=31 // pred_check_branch
          %1124 = sbr.rel (%p1122) target = $region48
        $region47: #{tpu_custom_call.1} parent=31 // pred_region
          %s1125 = smul.u32 16, %s25
          %s1126 = smul.u32 4, %s26
          %s1128 = ssub.s32 4096, 4096
          %1129 = vsyncadd %s1118, %s1128
          %s1130 = smul.addr %s1125, 4
          %s1131 = sadd.s32 %s1126, %s1130
          %s1132 = smul.addr %s1131, 64
          %s1133 = scalar_lea.hbm %s3, %s1132
          %s1134 = sshll.u32 %s1121, 4
          %s1135 = int_to_ptr.vmem [resolvable:$true] %s1134
          %1140 = dma.vmem_to_hbm [thread:$0]  %s1135, 4096, %s1133, %s1118, 256, 256, 16
        $region48: #{tpu_custom_call.1} parent=31 // pred_fallthru
          _
      $region32: #{tpu_custom_call.1} parent=5 // pred_fallthru
        _
      %p1141 = scmp.le.s32.totalorder 2, %s16
      // Predicated region
      $region49: #{tpu_custom_call.1} parent=5 // pred_check
        %p1142 = pneg %p1141
      $region50: #{tpu_custom_call.1} parent=5 // pred_check_branch
        %1144 = sbr.rel (%p1142) target = $region52
      $region51: #{tpu_custom_call.1} parent=5 // pred_region
        %s1145 = ssub.s32 %s16, 2
        // Predicated region
        $region53: #{tpu_custom_call.1} parent=51 // pred_check
          %p1146 = pneg %p137
        $region54: #{tpu_custom_call.1} parent=51 // pred_check_branch
          %1148 = sbr.rel (%p1146) target = $region56
        $region55: #{tpu_custom_call.1} parent=51 // pred_region
          %s1149 = sand.u32 %s122, 1
          %s1150 = scalar_lea.sflag [#allocation4], %s1149
          %s1151 = sand.u32 %s122, 1
          %s1152 = smul.addr %s1151, 256
          %s1153 = scalar_lea.vmem [#allocation8], %s1152
          %1154 = dma.done %s1150, 4096
        $region56: #{tpu_custom_call.1} parent=51 // pred_fallthru
          _
      $region52: #{tpu_custom_call.1} parent=5 // pred_fallthru
        _
    $region6: #{tpu_custom_call.1} parent=1 // loop_footer
      %s20 = sadd.s32 1, %s16
    $region7: #{tpu_custom_call.1} parent=1 // loop_footer_branch
      %15 = sbr.rel target = $region3
    $region8: #{tpu_custom_call.1} parent=1 // loop_exit
      _
    %1155 = vsyncpa [#allocation3], 1
    %s1156 = scalar_lea.sflag [#allocation3], 1
    %1157 = vsyncpa %s1156, 1
    %1158 = vsyncpa [#allocation6], 1
    %1159 = vsyncpa [#allocation4], 1
    %s1160 = scalar_lea.sflag [#allocation4], 1
    %1161 = vsyncpa %s1160, 1

</llo_original>
